<compile_context>
chip_gen: v6e
topology: v6e:2x2x1
jax: 0.10.0
libtpu: 0.0.40
codegen_flags: <defaults>
</compile_context>

<pallas_src>
import math
import functools

import jax
import jax.numpy as jnp
from jax.experimental import pallas as pl
from jax.experimental.pallas import tpu as pltpu


def _round_up(x, m):
    return ((x + m - 1) // m) * m


def _choose_batch_tiling(B, max_rows_per_tile):
    """Pick (rows_per_tile, grid_steps) for the batch dimension.

    Small batches use a single full-batch tile (block dims equal to the array
    dims need no (8,128) alignment).  Larger batches use an even number of
    grid steps (>= 2) so v7x megacore can shard them across both TensorCores,
    with TB a multiple of 128 so the lane-dense output stores stay unmasked.
    """
    if B <= 256:
        return B, 1
    n_steps = max(2, pl.cdiv(B, max_rows_per_tile))
    if n_steps % 2:
        n_steps += 1
    TB = _round_up(pl.cdiv(B, n_steps), 128)
    return TB, pl.cdiv(B, TB)


# ---------------------------------------------------------------------------
# Fused MLP kernel: all layers unrolled, activations stay lane-dense in vregs.
# ---------------------------------------------------------------------------
def _mlp_fused_kernel(x_ref, *refs, num_layers, last_as_reduce):
    # refs = (w0, b0, w1, b1, ..., w_{L-1}, b_{L-1}, o_ref)
    o_ref = refs[-1]
    wb = refs[:-1]

    h = x_ref[...].astype(jnp.float32)          # (TB, F): batch on sublanes
    for layer in range(num_layers):
        w = wb[2 * layer][...].astype(jnp.float32)
        b = wb[2 * layer + 1][...].astype(jnp.float32)   # (out, 1) column
        is_last = layer == num_layers - 1
        if layer == 0:
            # Contract over features (w:(out,F) x x:(TB,F) over F) so the
            # batch lands on lanes: result (out, TB).  Same Q@K^T-style
            # contraction pattern as flash attention.
            y = jax.lax.dot_general(
                w, h, (((1,), (1,)), ((), ())),
                precision=jax.lax.Precision.HIGHEST,
                preferred_element_type=jnp.float32) + b
        elif is_last and last_as_reduce:
            # Final (hidden -> 1) projection: (hidden, 1) weight column
            # broadcast over lanes + sublane reduce.  Avoids a
            # 1-useful-row MXU matmul.
            y = jnp.sum(h * w, axis=0, keepdims=True) + b
        else:
            y = jnp.dot(w, h,
                        precision=jax.lax.Precision.HIGHEST,
                        preferred_element_type=jnp.float32) + b
        h = y if is_last else jnp.tanh(y)
    o_ref[...] = h.astype(o_ref.dtype)          # dense (out_dim, TB) store


def mlp_critic_forward(params, x, *, max_rows_per_tile=4096):
    """Fused MLPCritic forward: one pallas_call for the whole network.

    params: list of (w, b) with PyTorch layout w:(out, in), b:(out, 1).
    x: (B, F), float32 or bfloat16.  Returns (B, out_dim) float32.
    """
    num_layers = len(params)
    B, F = x.shape
    out_dim = params[-1][0].shape[0]
    last_as_reduce = (out_dim == 1) and (num_layers >= 2)

    # Keep double-buffered x tiles comfortably inside v7x's 32 MiB scoped VMEM
    # (64 MiB physical); 8192 rows * 32 feats * 4 B * 2 bufs = 2 MiB worst case.
    max_rows_per_tile = min(max_rows_per_tile, 8192)
    TB, grid = _choose_batch_tiling(B, max_rows_per_tile)

    flat_inputs = [x]
    in_specs = [pl.BlockSpec((TB, F), lambda i: (i, 0))]
    for idx, (w, b) in enumerate(params):
        is_last = idx == num_layers - 1
        # Last layer of the reduce path is passed as a (hidden, 1) column so
        # it broadcasts along lanes inside the kernel.
        w_in = w.T if (is_last and last_as_reduce) else w
        flat_inputs += [w_in, b]
        in_specs += [
            pl.BlockSpec(w_in.shape, lambda i: (0, 0)),   # VMEM-resident weights
            pl.BlockSpec(b.shape, lambda i: (0, 0)),      # VMEM-resident bias
        ]

    kernel = functools.partial(
        _mlp_fused_kernel,
        num_layers=num_layers,
        last_as_reduce=last_as_reduce,
    )

    out_t = pl.pallas_call(
        kernel,
        out_shape=jax.ShapeDtypeStruct((out_dim, B), jnp.float32),
        grid=(grid,),
        in_specs=in_specs,
        out_specs=pl.BlockSpec((out_dim, TB), lambda i: (0, i)),
        compiler_params=pltpu.CompilerParams(
            dimension_semantics=("parallel",),   # megacore split on v7x
        ),
    )(*flat_inputs)

    # (out_dim, B) -> (B, out_dim); for out_dim == 1 this is just a reshape.
    return out_t.T


# ---------------------------------------------------------------------------
# Parameter init (mimics nn.Linear's U(-1/sqrt(in), 1/sqrt(in)), PyTorch layout)
# ---------------------------------------------------------------------------
def init_mlp_critic_params(key, num_layers, input_dim, hidden_dim, output_dim):
    if num_layers < 1:
        raise ValueError("number of layers should be positive!")
    if num_layers == 1:
        dims = [(input_dim, output_dim)]
    else:
        dims = [(input_dim, hidden_dim)]
        dims += [(hidden_dim, hidden_dim)] * (num_layers - 2)
        dims += [(hidden_dim, output_dim)]

    params = []
    for (din, dout) in dims:
        key, kw, kb = jax.random.split(key, 3)
        bound = 1.0 / math.sqrt(din)
        w = jax.random.uniform(kw, (dout, din), jnp.float32, -bound, bound)  # (out, in)
        b = jax.random.uniform(kb, (dout, 1), jnp.float32, -bound, bound)    # (out, 1)
        params.append((w, b))
    return params


# ---------------------------------------------------------------------------
# Pure-JAX reference (PyTorch semantics: y = x @ W^T + b, tanh on hidden layers)
# ---------------------------------------------------------------------------
def mlp_critic_reference(params, x):
    n = len(params)
    h = x.astype(jnp.float32)
    for i, (w, b) in enumerate(params):
        y = jnp.dot(h, w.T, precision=jax.lax.Precision.HIGHEST) + b.T
        h = y if i == n - 1 else jnp.tanh(y)
    return h


if __name__ == "__main__":
    # Small, module-consistent shapes: critic over per-sample feature vectors.
    num_layers, input_dim, hidden_dim, output_dim = 3, 32, 32, 1

    key = jax.random.PRNGKey(0)
    key_p, key_x1, key_x2 = jax.random.split(key, 3)
    params = init_mlp_critic_params(
        key_p, num_layers, input_dim, hidden_dim, output_dim
    )

    # Case 1: tiny batch -> single full-batch tile.
    x_small = jax.random.normal(key_x1, (8, input_dim), jnp.float32)
    out_small = jax.block_until_ready(mlp_critic_forward(params, x_small))
    ref_small = mlp_critic_reference(params, x_small)
    assert out_small.shape == (8, output_dim), out_small.shape
    assert jnp.allclose(out_small, ref_small, atol=1e-4, rtol=1e-4), (
        "small-batch mismatch vs reference"
    )

    # Case 2: larger batch that doesn't divide the tile -> 2 grid steps with a
    # partial boundary tile (no wrapper-side padding copy of x).
    x_big = jax.random.normal(key_x2, (1030, input_dim), jnp.float32)
    out_big = jax.block_until_ready(mlp_critic_forward(params, x_big))
    ref_big = mlp_critic_reference(params, x_big)
    assert out_big.shape == (1030, output_dim), out_big.shape
    assert jnp.allclose(out_big, ref_big, atol=1e-4, rtol=1e-4), (
        "batched-grid mismatch vs reference"
    )

    # Case 3: bf16-stored activations (halves the B-scaling HBM traffic on
    # v6e/v7x); elementwise math stays f32 inside the kernel.
    x_bf16 = x_big.astype(jnp.bfloat16)
    out_bf16 = jax.block_until_ready(mlp_critic_forward(params, x_bf16))
    ref_bf16 = mlp_critic_reference(params, x_bf16.astype(jnp.float32))
    assert out_bf16.shape == (1030, output_dim), out_bf16.shape
    assert jnp.allclose(out_bf16, ref_bf16, atol=1e-3, rtol=1e-3), (
        "bf16-input mismatch vs reference"
    )

    print("KERNEL_OK")
</pallas_src>

<mosaic_0001>
module attributes {stable_mosaic.version = 11 : i64} {
  func.func @_mlp_fused_kernel(%arg0: i32, %arg1: memref<8x32xf32, #tpu.memory_space<vmem>>, %arg2: memref<32x32xf32, #tpu.memory_space<vmem>>, %arg3: memref<32x1xf32, #tpu.memory_space<vmem>>, %arg4: memref<32x32xf32, #tpu.memory_space<vmem>>, %arg5: memref<32x1xf32, #tpu.memory_space<vmem>>, %arg6: memref<32x1xf32, #tpu.memory_space<vmem>>, %arg7: memref<1x1xf32, #tpu.memory_space<vmem>>, %arg8: memref<1x8xf32, #tpu.memory_space<vmem>>) attributes {dimension_semantics = [#tpu.dimension_semantics<parallel>], iteration_bounds = array<i64: 1>, scalar_prefetch = 0 : i64, scratch_operands = 0 : i64, tpu.core_type = #tpu.core_type<tc>, window_params = [{transform_indices = @transform_0, window_bounds = array<i64: 8, 32>}, {pipeline_mode = #tpu.pipeline_mode<synchronous>, transform_indices = @transform_1, window_bounds = array<i64: 32, 32>}, {pipeline_mode = #tpu.pipeline_mode<synchronous>, transform_indices = @transform_2, window_bounds = array<i64: 32, 1>}, {pipeline_mode = #tpu.pipeline_mode<synchronous>, transform_indices = @transform_3, window_bounds = array<i64: 32, 32>}, {pipeline_mode = #tpu.pipeline_mode<synchronous>, transform_indices = @transform_4, window_bounds = array<i64: 32, 1>}, {pipeline_mode = #tpu.pipeline_mode<synchronous>, transform_indices = @transform_5, window_bounds = array<i64: 32, 1>}, {pipeline_mode = #tpu.pipeline_mode<synchronous>, transform_indices = @transform_6, window_bounds = array<i64: 1, 1>}, {transform_indices = @transform_7, window_bounds = array<i64: 1, 8>}]} {
    %c0 = arith.constant 0 : index
    %c0_0 = arith.constant 0 : index
    %0 = vector.load %arg1[%c0, %c0_0] : memref<8x32xf32, #tpu.memory_space<vmem>>, vector<8x32xf32>
    %c0_1 = arith.constant 0 : index
    %c0_2 = arith.constant 0 : index
    %1 = vector.load %arg2[%c0_1, %c0_2] : memref<32x32xf32, #tpu.memory_space<vmem>>, vector<32x32xf32>
    %c0_3 = arith.constant 0 : index
    %c0_4 = arith.constant 0 : index
    %2 = vector.load %arg3[%c0_3, %c0_4] : memref<32x1xf32, #tpu.memory_space<vmem>>, vector<32x1xf32>
    %cst = arith.constant dense<0.000000e+00> : vector<32x8xf32>
    %3 = tpu.matmul %1, %0, %cst {dimension_numbers = #tpu.dot_dimension_numbers<[1], [1], [0], [0], [0, 0, 1, 0], [], []>, precision = #tpu.contract_precision<fp32>} : vector<32x32xf32>, vector<8x32xf32>, vector<32x8xf32> -> vector<32x8xf32>
    %4 = vector.broadcast %2 : vector<32x1xf32> to vector<32x8xf32>
    %5 = arith.addf %3, %4 : vector<32x8xf32>
    %6 = math.tanh %5 : vector<32x8xf32>
    %c0_5 = arith.constant 0 : index
    %c0_6 = arith.constant 0 : index
    %7 = vector.load %arg4[%c0_5, %c0_6] : memref<32x32xf32, #tpu.memory_space<vmem>>, vector<32x32xf32>
    %c0_7 = arith.constant 0 : index
    %c0_8 = arith.constant 0 : index
    %8 = vector.load %arg5[%c0_7, %c0_8] : memref<32x1xf32, #tpu.memory_space<vmem>>, vector<32x1xf32>
    %cst_9 = arith.constant dense<0.000000e+00> : vector<32x8xf32>
    %9 = tpu.matmul %7, %6, %cst_9 {dimension_numbers = #tpu.dot_dimension_numbers<[1], [0], [0], [1], [0, 0, 1, 1], [], []>, precision = #tpu.contract_precision<fp32>} : vector<32x32xf32>, vector<32x8xf32>, vector<32x8xf32> -> vector<32x8xf32>
    %10 = vector.broadcast %8 : vector<32x1xf32> to vector<32x8xf32>
    %11 = arith.addf %9, %10 : vector<32x8xf32>
    %12 = math.tanh %11 : vector<32x8xf32>
    %c0_10 = arith.constant 0 : index
    %c0_11 = arith.constant 0 : index
    %13 = vector.load %arg6[%c0_10, %c0_11] : memref<32x1xf32, #tpu.memory_space<vmem>>, vector<32x1xf32>
    %c0_12 = arith.constant 0 : index
    %c0_13 = arith.constant 0 : index
    %14 = vector.load %arg7[%c0_12, %c0_13] : memref<1x1xf32, #tpu.memory_space<vmem>>, vector<1x1xf32>
    %15 = vector.broadcast %13 : vector<32x1xf32> to vector<32x8xf32>
    %16 = arith.mulf %12, %15 : vector<32x8xf32>
    %cst_14 = arith.constant dense<0.000000e+00> : vector<8xf32>
    %17 = vector.multi_reduction <add>, %16, %cst_14 [0] : vector<32x8xf32> to vector<8xf32>
    %18 = vector.shape_cast %17 : vector<8xf32> to vector<1x8xf32>
    %19 = vector.broadcast %14 : vector<1x1xf32> to vector<1x8xf32>
    %20 = arith.addf %18, %19 : vector<1x8xf32>
    %c0_15 = arith.constant 0 : index
    %c0_16 = arith.constant 0 : index
    %21 = vector.load %arg8[%c0_15, %c0_16] : memref<1x8xf32, #tpu.memory_space<vmem>>, vector<1x8xf32>
    tpu.vector_store %arg8[%c0_15, %c0_16], %20 {strides = array<i32>} : memref<1x8xf32, #tpu.memory_space<vmem>>, vector<1x8xf32>,
    return
  }
  func.func @transform_0(%arg0: i32) -> (i32, i32) {
    %c0_i32 = arith.constant 0 : i32
    %c0_i32_0 = arith.constant 0 : i32
    return %arg0, %c0_i32 : i32, i32
  }
  func.func @transform_1(%arg0: i32) -> (i32, i32) {
    %c0_i32 = arith.constant 0 : i32
    %c0_i32_0 = arith.constant 0 : i32
    %c0_i32_1 = arith.constant 0 : i32
    return %c0_i32, %c0_i32_0 : i32, i32
  }
  func.func @transform_2(%arg0: i32) -> (i32, i32) {
    %c0_i32 = arith.constant 0 : i32
    %c0_i32_0 = arith.constant 0 : i32
    %c0_i32_1 = arith.constant 0 : i32
    return %c0_i32, %c0_i32_0 : i32, i32
  }
  func.func @transform_3(%arg0: i32) -> (i32, i32) {
    %c0_i32 = arith.constant 0 : i32
    %c0_i32_0 = arith.constant 0 : i32
    %c0_i32_1 = arith.constant 0 : i32
    return %c0_i32, %c0_i32_0 : i32, i32
  }
  func.func @transform_4(%arg0: i32) -> (i32, i32) {
    %c0_i32 = arith.constant 0 : i32
    %c0_i32_0 = arith.constant 0 : i32
    %c0_i32_1 = arith.constant 0 : i32
    return %c0_i32, %c0_i32_0 : i32, i32
  }
  func.func @transform_5(%arg0: i32) -> (i32, i32) {
    %c0_i32 = arith.constant 0 : i32
    %c0_i32_0 = arith.constant 0 : i32
    %c0_i32_1 = arith.constant 0 : i32
    return %c0_i32, %c0_i32_0 : i32, i32
  }
  func.func @transform_6(%arg0: i32) -> (i32, i32) {
    %c0_i32 = arith.constant 0 : i32
    %c0_i32_0 = arith.constant 0 : i32
    %c0_i32_1 = arith.constant 0 : i32
    return %c0_i32, %c0_i32_0 : i32, i32
  }
  func.func @transform_7(%arg0: i32) -> (i32, i32) {
    %c0_i32 = arith.constant 0 : i32
    %c0_i32_0 = arith.constant 0 : i32
    return %c0_i32, %arg0 : i32, i32
  }
}

</mosaic_0001>

<llo_original>
// kernel: tpu_custom_call.1
$region0: #{tpu_custom_call.1}
  #allocation0 [shape = 'u32[]', space=smem, size = 0x4, offset = 0x4, fixed_abs, tag = 'smem constant byte address 0x4 - core index']
  #allocation1 [shape = 'u32[144,128]{1,0:T(1,128)}', space=vmem, size = 0x12000, scoped, tag = 'internal scratch']
  #allocation2 [shape = 'f32[1,1]{1,0:T(1,128)S(1)}', space=vmem, size = 0x200, scoped, tag = 'scoped memory for tpu_custom_call.1']
  %s0 = inlined_call_operand.vmem [shape: f32[8,32], index: 0, kind: input, shape index: {}]
  %s1 = inlined_call_operand.vmem [shape: f32[32,32], index: 1, kind: input, shape index: {}]
  %s2 = inlined_call_operand.vmem [shape: f32[32,1], index: 2, kind: input, shape index: {}]
  %s3 = inlined_call_operand.vmem [shape: f32[32,32], index: 3, kind: input, shape index: {}]
  %s4 = inlined_call_operand.vmem [shape: f32[32,1], index: 4, kind: input, shape index: {}]
  %s5 = inlined_call_operand.vmem [shape: f32[32,1], index: 5, kind: input, shape index: {}]
  %s6 = inlined_call_operand.<no memory space> [shape: f32[1,1], index: 6, kind: input, shape index: {}]
  %s7 = inlined_call_operand.hbm [shape: f32[1,8], index: 7, kind: output, shape index: {}]
  %s8 = sld [smem:[#allocation0]]
  $region38: #{tpu_custom_call.1} parent=0
    _
  %s10 = ssub.s32 1, %s8
  %s11 = scalar_select 0, %s10, %s8
  %v12 = vstv %s6
  %13 = vst [vmem:[#allocation2] sm:$0x1] %v12
  $region1: #{tpu_custom_call.1} parent=0
    #allocation3 [shape = 'u8[512]{0}', space=vmem, size = 0x400, scoped, tag = 'output window, operand 0, single buffered']
    #allocation4 [shape = 's32[1]{0}', space=sflag, size = 0x4, scoped, tag = 'scoped memory for tpu_custom_call.1']
    %14 = vsyncpa [#allocation4], 0
    // Predicated region
    $region2: #{tpu_custom_call.1} parent=1 // pred_check
      _
    $region3: #{tpu_custom_call.1} parent=1 // pred_check_branch
      %16 = sbr.rel (0) target = $region5
    $region4: #{tpu_custom_call.1} parent=1 // pred_region
      _
    $region5: #{tpu_custom_call.1} parent=1 // pred_fallthru
      _
    // Predicated region
    $region6: #{tpu_custom_call.1} parent=1 // pred_check
      _
    $region7: #{tpu_custom_call.1} parent=1 // pred_check_branch
      %18 = sbr.rel (0) target = $region9
    $region8: #{tpu_custom_call.1} parent=1 // pred_region
      _
    $region9: #{tpu_custom_call.1} parent=1 // pred_fallthru
      _
    // Predicated region
    $region10: #{tpu_custom_call.1} parent=1 // pred_check
      _
    $region11: #{tpu_custom_call.1} parent=1 // pred_check_branch
      %20 = sbr.rel (0) target = $region13
    $region12: #{tpu_custom_call.1} parent=1 // pred_region
      _
    $region13: #{tpu_custom_call.1} parent=1 // pred_fallthru
      _
    // Predicated region
    $region14: #{tpu_custom_call.1} parent=1 // pred_check
      _
    $region15: #{tpu_custom_call.1} parent=1 // pred_check_branch
      %22 = sbr.rel (0) target = $region17
    $region16: #{tpu_custom_call.1} parent=1 // pred_region
      _
    $region17: #{tpu_custom_call.1} parent=1 // pred_fallthru
      _
    // Predicated region
    $region18: #{tpu_custom_call.1} parent=1 // pred_check
      _
    $region19: #{tpu_custom_call.1} parent=1 // pred_check_branch
      %24 = sbr.rel (0) target = $region21
    $region20: #{tpu_custom_call.1} parent=1 // pred_region
      _
    $region21: #{tpu_custom_call.1} parent=1 // pred_fallthru
      _
    // Predicated region
    $region22: #{tpu_custom_call.1} parent=1 // pred_check
      _
    $region23: #{tpu_custom_call.1} parent=1 // pred_check_branch
      %26 = sbr.rel (0) target = $region25
    $region24: #{tpu_custom_call.1} parent=1 // pred_region
      _
    $region25: #{tpu_custom_call.1} parent=1 // pred_fallthru
      _
    // Predicated region
    $region26: #{tpu_custom_call.1} parent=1 // pred_check
      _
    $region27: #{tpu_custom_call.1} parent=1 // pred_check_branch
      %28 = sbr.rel (0) target = $region29
    $region28: #{tpu_custom_call.1} parent=1 // pred_region
      _
    $region29: #{tpu_custom_call.1} parent=1 // pred_fallthru
      _
    %v29 = vld [vmem:[%s0] sm:$0xff]
    %v30 = vld [vmem:[%s1] sm:$0xff]
    %v31 = vld [vmem:[%s1 + $0x8] sm:$0xff]
    %v32 = vld [vmem:[%s1 + $0x10] sm:$0xff]
    %v33 = vld [vmem:[%s1 + $0x18] sm:$0xff]
    %v34 = vld [vmem:[%s2] sm:$0xff]
    %v35 = vld [vmem:[%s2 + $0x8] sm:$0xff]
    %v36 = vld [vmem:[%s2 + $0x10] sm:$0xff]
    %v37 = vld [vmem:[%s2 + $0x18] sm:$0xff]
    %39 = vset.pattern.permute.xlu0 0
    %40 = vperm.xlu0 %39, %v34
    %v41 = vpop.permute.xlu0 %40
    %44 = vset.pattern.permute.xlu0 0
    %45 = vperm.xlu0 %44, %v35
    %v46 = vpop.permute.xlu0 %45
    %49 = vset.pattern.permute.xlu0 0
    %50 = vperm.xlu0 %49, %v36
    %v51 = vpop.permute.xlu0 %50
    %54 = vset.pattern.permute.xlu0 0
    %55 = vperm.xlu0 %54, %v37
    %v56 = vpop.permute.xlu0 %55
    %vm58 = vcmask 261120
    %v60 = vsel %vm58, %v30, 0
    %v63 = vsel %vm58, %v31, 0
    %v66 = vsel %vm58, %v32, 0
    %v69 = vsel %vm58, %v33, 0
    %v72 = vsel %vm58, %v29, 0
    %74 = vmatprep.subr.mxu0 0.0
    %75 = vmatpush1.xpose.msra.mxu0 0.0
    %76 = vmatprep.subr.mxu0 0.0
    %77 = vmatpush1.xpose.msra.mxu0 0.0
    %78 = vmatprep.subr.mxu0 0.0
    %79 = vmatpush1.xpose.msra.mxu0 0.0
    %80 = vmatprep.subr.mxu0 0.0
    %81 = vmatpush1.xpose.msra.mxu0 0.0
    %82 = vmatprep.subr.mxu0 0.0
    %83 = vmatpush1.xpose.msra.mxu0 0.0
    %84 = vmatprep.subr.mxu0 0.0
    %85 = vmatpush1.xpose.msra.mxu0 0.0
    %86 = vmatprep.subr.mxu0 0.0
    %87 = vmatpush1.xpose.msra.mxu0 0.0
    %88 = vmatprep.subr.mxu0 0.0
    %89 = vmatpush1.xpose.msra.mxu0 0.0
    %90 = vmatprep.subr.mxu0 0.0
    %91 = vmatpush1.xpose.msra.mxu0 0.0
    %92 = vmatprep.subr.mxu0 0.0
    %93 = vmatpush1.xpose.msra.mxu0 0.0
    %94 = vmatprep.subr.mxu0 0.0
    %95 = vmatpush1.xpose.msra.mxu0 0.0
    %96 = vmatprep.subr.mxu0 0.0
    %97 = vmatpush1.xpose.msra.mxu0 0.0
    %98 = vmatprep.subr.mxu0 0.0
    %99 = vmatpush1.xpose.msra.mxu0 0.0
    %100 = vmatprep.subr.mxu0 0.0
    %101 = vmatpush1.xpose.msra.mxu0 0.0
    %102 = vmatprep.subr.mxu0 0.0
    %103 = vmatpush1.xpose.msra.mxu0 0.0
    %104 = vmatprep.subr.mxu0 0.0
    %v105 = vand.u32 %v72, 4294901760
    %106 = vmatpush1.xpose.msra.mxu0 %v105
    %107 = vmatprep.subr.mxu0 0.0
    %108 = vmatpush2.xpose.msra.mxu0 0.0
    %109 = vmatprep.subr.mxu0 0.0
    %110 = vmatpush2.xpose.msra.mxu0 0.0
    %111 = vmatprep.subr.mxu0 0.0
    %112 = vmatpush2.xpose.msra.mxu0 0.0
    %113 = vmatprep.subr.mxu0 0.0
    %114 = vmatpush2.xpose.msra.mxu0 0.0
    %115 = vmatprep.subr.mxu0 0.0
    %116 = vmatpush2.xpose.msra.mxu0 0.0
    %117 = vmatprep.subr.mxu0 0.0
    %118 = vmatpush2.xpose.msra.mxu0 0.0
    %119 = vmatprep.subr.mxu0 0.0
    %120 = vmatpush2.xpose.msra.mxu0 0.0
    %121 = vmatprep.subr.mxu0 0.0
    %122 = vmatpush2.xpose.msra.mxu0 0.0
    %123 = vmatprep.subr.mxu0 0.0
    %124 = vmatpush2.xpose.msra.mxu0 0.0
    %125 = vmatprep.subr.mxu0 0.0
    %126 = vmatpush2.xpose.msra.mxu0 0.0
    %127 = vmatprep.subr.mxu0 0.0
    %128 = vmatpush2.xpose.msra.mxu0 0.0
    %129 = vmatprep.subr.mxu0 0.0
    %130 = vmatpush2.xpose.msra.mxu0 0.0
    %131 = vmatprep.subr.mxu0 0.0
    %132 = vmatpush2.xpose.msra.mxu0 0.0
    %133 = vmatprep.subr.mxu0 0.0
    %134 = vmatpush2.xpose.msra.mxu0 0.0
    %135 = vmatprep.subr.mxu0 0.0
    %136 = vmatpush2.xpose.msra.mxu0 0.0
    %137 = vmatprep.subr.mxu0 0.0
    %138 = vmatpush2.xpose.msra.mxu0 0.0
    %139 = vmatprep.mubr.f32.mxu0 0.0
    %v140 = vand.u32 %v60, 4294901760
    %v141 = vsub.f32 %v60, %v140
    %v142 = vand.u32 %v141, 4294901760
    %v143 = vsub.f32 %v141, %v142
    %v144 = vand.u32 %v143, 4294901760
    %145 = vmatmul.mubr.f32.gmra.mxu0 %v144
    %v146 = vpop.f32.mrf.mxu0
    %v147 = vadd.f32 %v41, %v146
    %v148 = vpop.f32.mrf.mxu0
    %149 = vmatprep.mubr.f32.mxu0 0.0
    %v150 = vand.u32 %v63, 4294901760
    %v151 = vsub.f32 %v63, %v150
    %v152 = vand.u32 %v151, 4294901760
    %v153 = vsub.f32 %v151, %v152
    %v154 = vand.u32 %v153, 4294901760
    %155 = vmatmul.mubr.f32.gmra.mxu0 %v154
    %v156 = vpop.f32.mrf.mxu0
    %v157 = vadd.f32 %v46, %v156
    %v158 = vpop.f32.mrf.mxu0
    %159 = vmatprep.mubr.f32.mxu0 0.0
    %v160 = vand.u32 %v66, 4294901760
    %v161 = vsub.f32 %v66, %v160
    %v162 = vand.u32 %v161, 4294901760
    %v163 = vsub.f32 %v161, %v162
    %v164 = vand.u32 %v163, 4294901760
    %165 = vmatmul.mubr.f32.gmra.mxu0 %v164
    %v166 = vpop.f32.mrf.mxu0
    %v167 = vadd.f32 %v51, %v166
    %v168 = vpop.f32.mrf.mxu0
    %169 = vmatprep.mubr.f32.mxu0 0.0
    %v170 = vand.u32 %v69, 4294901760
    %v171 = vsub.f32 %v69, %v170
    %v172 = vand.u32 %v171, 4294901760
    %v173 = vsub.f32 %v171, %v172
    %v174 = vand.u32 %v173, 4294901760
    %175 = vmatmul.mubr.f32.gmra.mxu0 %v174
    %v176 = vpop.f32.mrf.mxu0
    %v177 = vadd.f32 %v56, %v176
    %v178 = vpop.f32.mrf.mxu0
    %179 = vdwg.mxu0
    %180 = vmatprep.subr.mxu0 0.0
    %181 = vmatpush1.xpose.msra.mxu0 0.0
    %182 = vmatprep.subr.mxu0 0.0
    %183 = vmatpush1.xpose.msra.mxu0 0.0
    %184 = vmatprep.subr.mxu0 0.0
    %185 = vmatpush1.xpose.msra.mxu0 0.0
    %186 = vmatprep.subr.mxu0 0.0
    %187 = vmatpush1.xpose.msra.mxu0 0.0
    %188 = vmatprep.subr.mxu0 0.0
    %189 = vmatpush1.xpose.msra.mxu0 0.0
    %190 = vmatprep.subr.mxu0 0.0
    %191 = vmatpush1.xpose.msra.mxu0 0.0
    %192 = vmatprep.subr.mxu0 0.0
    %193 = vmatpush1.xpose.msra.mxu0 0.0
    %194 = vmatprep.subr.mxu0 0.0
    %195 = vmatpush1.xpose.msra.mxu0 0.0
    %196 = vmatprep.subr.mxu0 0.0
    %197 = vmatpush1.xpose.msra.mxu0 0.0
    %198 = vmatprep.subr.mxu0 0.0
    %199 = vmatpush1.xpose.msra.mxu0 0.0
    %200 = vmatprep.subr.mxu0 0.0
    %201 = vmatpush1.xpose.msra.mxu0 0.0
    %202 = vmatprep.subr.mxu0 0.0
    %203 = vmatpush1.xpose.msra.mxu0 0.0
    %204 = vmatprep.subr.mxu0 0.0
    %205 = vmatpush1.xpose.msra.mxu0 0.0
    %206 = vmatprep.subr.mxu0 0.0
    %207 = vmatpush1.xpose.msra.mxu0 0.0
    %208 = vmatprep.subr.mxu0 0.0
    %209 = vmatpush1.xpose.msra.mxu0 0.0
    %210 = vmatprep.subr.mxu0 0.0
    %v211 = vand.u32 %v72, 4294901760
    %v212 = vsub.f32 %v72, %v211
    %v213 = vand.u32 %v212, 4294901760
    %v214 = vsub.f32 %v212, %v213
    %v215 = vand.u32 %v214, 4294901760
    %216 = vmatpush1.xpose.msra.mxu0 %v215
    %217 = vmatprep.subr.mxu0 0.0
    %218 = vmatpush2.xpose.msra.mxu0 0.0
    %219 = vmatprep.subr.mxu0 0.0
    %220 = vmatpush2.xpose.msra.mxu0 0.0
    %221 = vmatprep.subr.mxu0 0.0
    %222 = vmatpush2.xpose.msra.mxu0 0.0
    %223 = vmatprep.subr.mxu0 0.0
    %224 = vmatpush2.xpose.msra.mxu0 0.0
    %225 = vmatprep.subr.mxu0 0.0
    %226 = vmatpush2.xpose.msra.mxu0 0.0
    %227 = vmatprep.subr.mxu0 0.0
    %228 = vmatpush2.xpose.msra.mxu0 0.0
    %229 = vmatprep.subr.mxu0 0.0
    %230 = vmatpush2.xpose.msra.mxu0 0.0
    %231 = vmatprep.subr.mxu0 0.0
    %232 = vmatpush2.xpose.msra.mxu0 0.0
    %233 = vmatprep.subr.mxu0 0.0
    %234 = vmatpush2.xpose.msra.mxu0 0.0
    %235 = vmatprep.subr.mxu0 0.0
    %236 = vmatpush2.xpose.msra.mxu0 0.0
    %237 = vmatprep.subr.mxu0 0.0
    %238 = vmatpush2.xpose.msra.mxu0 0.0
    %239 = vmatprep.subr.mxu0 0.0
    %240 = vmatpush2.xpose.msra.mxu0 0.0
    %241 = vmatprep.subr.mxu0 0.0
    %242 = vmatpush2.xpose.msra.mxu0 0.0
    %243 = vmatprep.subr.mxu0 0.0
    %244 = vmatpush2.xpose.msra.mxu0 0.0
    %245 = vmatprep.subr.mxu0 0.0
    %246 = vmatpush2.xpose.msra.mxu0 0.0
    %247 = vmatprep.subr.mxu0 0.0
    %248 = vmatpush2.xpose.msra.mxu0 0.0
    %249 = vmatprep.mubr.f32.mxu0 0.0
    %v250 = vand.u32 %v60, 4294901760
    %251 = vmatmul.mubr.f32.gmra.mxu0 %v250
    %v252 = vpop.f32.mrf.mxu0
    %v253 = vadd.f32 %v147, %v252
    %v254 = vpop.f32.mrf.mxu0
    %255 = vmatprep.mubr.f32.mxu0 0.0
    %v256 = vand.u32 %v63, 4294901760
    %257 = vmatmul.mubr.f32.gmra.mxu0 %v256
    %v258 = vpop.f32.mrf.mxu0
    %v259 = vadd.f32 %v157, %v258
    %v260 = vpop.f32.mrf.mxu0
    %261 = vmatprep.mubr.f32.mxu0 0.0
    %v262 = vand.u32 %v66, 4294901760
    %263 = vmatmul.mubr.f32.gmra.mxu0 %v262
    %v264 = vpop.f32.mrf.mxu0
    %v265 = vadd.f32 %v167, %v264
    %v266 = vpop.f32.mrf.mxu0
    %267 = vmatprep.mubr.f32.mxu0 0.0
    %v268 = vand.u32 %v69, 4294901760
    %269 = vmatmul.mubr.f32.gmra.mxu0 %v268
    %v270 = vpop.f32.mrf.mxu0
    %v271 = vadd.f32 %v177, %v270
    %v272 = vpop.f32.mrf.mxu0
    %273 = vdwg.mxu0
    %274 = vmatprep.subr.mxu0 0.0
    %275 = vmatpush1.xpose.msra.mxu0 0.0
    %276 = vmatprep.subr.mxu0 0.0
    %277 = vmatpush1.xpose.msra.mxu0 0.0
    %278 = vmatprep.subr.mxu0 0.0
    %279 = vmatpush1.xpose.msra.mxu0 0.0
    %280 = vmatprep.subr.mxu0 0.0
    %281 = vmatpush1.xpose.msra.mxu0 0.0
    %282 = vmatprep.subr.mxu0 0.0
    %283 = vmatpush1.xpose.msra.mxu0 0.0
    %284 = vmatprep.subr.mxu0 0.0
    %285 = vmatpush1.xpose.msra.mxu0 0.0
    %286 = vmatprep.subr.mxu0 0.0
    %287 = vmatpush1.xpose.msra.mxu0 0.0
    %288 = vmatprep.subr.mxu0 0.0
    %289 = vmatpush1.xpose.msra.mxu0 0.0
    %290 = vmatprep.subr.mxu0 0.0
    %291 = vmatpush1.xpose.msra.mxu0 0.0
    %292 = vmatprep.subr.mxu0 0.0
    %293 = vmatpush1.xpose.msra.mxu0 0.0
    %294 = vmatprep.subr.mxu0 0.0
    %295 = vmatpush1.xpose.msra.mxu0 0.0
    %296 = vmatprep.subr.mxu0 0.0
    %297 = vmatpush1.xpose.msra.mxu0 0.0
    %298 = vmatprep.subr.mxu0 0.0
    %299 = vmatpush1.xpose.msra.mxu0 0.0
    %300 = vmatprep.subr.mxu0 0.0
    %301 = vmatpush1.xpose.msra.mxu0 0.0
    %302 = vmatprep.subr.mxu0 0.0
    %303 = vmatpush1.xpose.msra.mxu0 0.0
    %304 = vmatprep.subr.mxu0 0.0
    %v305 = vand.u32 %v72, 4294901760
    %v306 = vsub.f32 %v72, %v305
    %307 = vmatpush1.xpose.msra.mxu0 %v306
    %308 = vmatprep.subr.mxu0 0.0
    %309 = vmatpush2.xpose.msra.mxu0 0.0
    %310 = vmatprep.subr.mxu0 0.0
    %311 = vmatpush2.xpose.msra.mxu0 0.0
    %312 = vmatprep.subr.mxu0 0.0
    %313 = vmatpush2.xpose.msra.mxu0 0.0
    %314 = vmatprep.subr.mxu0 0.0
    %315 = vmatpush2.xpose.msra.mxu0 0.0
    %316 = vmatprep.subr.mxu0 0.0
    %317 = vmatpush2.xpose.msra.mxu0 0.0
    %318 = vmatprep.subr.mxu0 0.0
    %319 = vmatpush2.xpose.msra.mxu0 0.0
    %320 = vmatprep.subr.mxu0 0.0
    %321 = vmatpush2.xpose.msra.mxu0 0.0
    %322 = vmatprep.subr.mxu0 0.0
    %323 = vmatpush2.xpose.msra.mxu0 0.0
    %324 = vmatprep.subr.mxu0 0.0
    %325 = vmatpush2.xpose.msra.mxu0 0.0
    %326 = vmatprep.subr.mxu0 0.0
    %327 = vmatpush2.xpose.msra.mxu0 0.0
    %328 = vmatprep.subr.mxu0 0.0
    %329 = vmatpush2.xpose.msra.mxu0 0.0
    %330 = vmatprep.subr.mxu0 0.0
    %331 = vmatpush2.xpose.msra.mxu0 0.0
    %332 = vmatprep.subr.mxu0 0.0
    %333 = vmatpush2.xpose.msra.mxu0 0.0
    %334 = vmatprep.subr.mxu0 0.0
    %335 = vmatpush2.xpose.msra.mxu0 0.0
    %336 = vmatprep.subr.mxu0 0.0
    %337 = vmatpush2.xpose.msra.mxu0 0.0
    %338 = vmatprep.subr.mxu0 0.0
    %339 = vmatpush2.xpose.msra.mxu0 0.0
    %340 = vmatprep.mubr.f32.mxu0 0.0
    %v341 = vand.u32 %v60, 4294901760
    %v342 = vsub.f32 %v60, %v341
    %343 = vmatmul.mubr.f32.gmra.mxu0 %v342
    %v344 = vpop.f32.mrf.mxu0
    %v345 = vadd.f32 %v253, %v344
    %v346 = vpop.f32.mrf.mxu0
    %347 = vmatprep.mubr.f32.mxu0 0.0
    %v348 = vand.u32 %v63, 4294901760
    %v349 = vsub.f32 %v63, %v348
    %350 = vmatmul.mubr.f32.gmra.mxu0 %v349
    %v351 = vpop.f32.mrf.mxu0
    %v352 = vadd.f32 %v259, %v351
    %v353 = vpop.f32.mrf.mxu0
    %354 = vmatprep.mubr.f32.mxu0 0.0
    %v355 = vand.u32 %v66, 4294901760
    %v356 = vsub.f32 %v66, %v355
    %357 = vmatmul.mubr.f32.gmra.mxu0 %v356
    %v358 = vpop.f32.mrf.mxu0
    %v359 = vadd.f32 %v265, %v358
    %v360 = vpop.f32.mrf.mxu0
    %361 = vmatprep.mubr.f32.mxu0 0.0
    %v362 = vand.u32 %v69, 4294901760
    %v363 = vsub.f32 %v69, %v362
    %364 = vmatmul.mubr.f32.gmra.mxu0 %v363
    %v365 = vpop.f32.mrf.mxu0
    %v366 = vadd.f32 %v271, %v365
    %v367 = vpop.f32.mrf.mxu0
    %368 = vdwg.mxu0
    %369 = vmatprep.subr.mxu0 0.0
    %370 = vmatpush1.xpose.msra.mxu0 0.0
    %371 = vmatprep.subr.mxu0 0.0
    %372 = vmatpush1.xpose.msra.mxu0 0.0
    %373 = vmatprep.subr.mxu0 0.0
    %374 = vmatpush1.xpose.msra.mxu0 0.0
    %375 = vmatprep.subr.mxu0 0.0
    %376 = vmatpush1.xpose.msra.mxu0 0.0
    %377 = vmatprep.subr.mxu0 0.0
    %378 = vmatpush1.xpose.msra.mxu0 0.0
    %379 = vmatprep.subr.mxu0 0.0
    %380 = vmatpush1.xpose.msra.mxu0 0.0
    %381 = vmatprep.subr.mxu0 0.0
    %382 = vmatpush1.xpose.msra.mxu0 0.0
    %383 = vmatprep.subr.mxu0 0.0
    %384 = vmatpush1.xpose.msra.mxu0 0.0
    %385 = vmatprep.subr.mxu0 0.0
    %386 = vmatpush1.xpose.msra.mxu0 0.0
    %387 = vmatprep.subr.mxu0 0.0
    %388 = vmatpush1.xpose.msra.mxu0 0.0
    %389 = vmatprep.subr.mxu0 0.0
    %390 = vmatpush1.xpose.msra.mxu0 0.0
    %391 = vmatprep.subr.mxu0 0.0
    %392 = vmatpush1.xpose.msra.mxu0 0.0
    %393 = vmatprep.subr.mxu0 0.0
    %394 = vmatpush1.xpose.msra.mxu0 0.0
    %395 = vmatprep.subr.mxu0 0.0
    %396 = vmatpush1.xpose.msra.mxu0 0.0
    %397 = vmatprep.subr.mxu0 0.0
    %398 = vmatpush1.xpose.msra.mxu0 0.0
    %399 = vmatprep.subr.mxu0 0.0
    %v400 = vand.u32 %v72, 4294901760
    %401 = vmatpush1.xpose.msra.mxu0 %v400
    %402 = vmatprep.subr.mxu0 0.0
    %403 = vmatpush2.xpose.msra.mxu0 0.0
    %404 = vmatprep.subr.mxu0 0.0
    %405 = vmatpush2.xpose.msra.mxu0 0.0
    %406 = vmatprep.subr.mxu0 0.0
    %407 = vmatpush2.xpose.msra.mxu0 0.0
    %408 = vmatprep.subr.mxu0 0.0
    %409 = vmatpush2.xpose.msra.mxu0 0.0
    %410 = vmatprep.subr.mxu0 0.0
    %411 = vmatpush2.xpose.msra.mxu0 0.0
    %412 = vmatprep.subr.mxu0 0.0
    %413 = vmatpush2.xpose.msra.mxu0 0.0
    %414 = vmatprep.subr.mxu0 0.0
    %415 = vmatpush2.xpose.msra.mxu0 0.0
    %416 = vmatprep.subr.mxu0 0.0
    %417 = vmatpush2.xpose.msra.mxu0 0.0
    %418 = vmatprep.subr.mxu0 0.0
    %419 = vmatpush2.xpose.msra.mxu0 0.0
    %420 = vmatprep.subr.mxu0 0.0
    %421 = vmatpush2.xpose.msra.mxu0 0.0
    %422 = vmatprep.subr.mxu0 0.0
    %423 = vmatpush2.xpose.msra.mxu0 0.0
    %424 = vmatprep.subr.mxu0 0.0
    %425 = vmatpush2.xpose.msra.mxu0 0.0
    %426 = vmatprep.subr.mxu0 0.0
    %427 = vmatpush2.xpose.msra.mxu0 0.0
    %428 = vmatprep.subr.mxu0 0.0
    %429 = vmatpush2.xpose.msra.mxu0 0.0
    %430 = vmatprep.subr.mxu0 0.0
    %431 = vmatpush2.xpose.msra.mxu0 0.0
    %432 = vmatprep.subr.mxu0 0.0
    %433 = vmatpush2.xpose.msra.mxu0 0.0
    %434 = vmatprep.mubr.f32.mxu0 0.0
    %v435 = vand.u32 %v60, 4294901760
    %v436 = vsub.f32 %v60, %v435
    %v437 = vand.u32 %v436, 4294901760
    %438 = vmatmul.mubr.f32.gmra.mxu0 %v437
    %v439 = vpop.f32.mrf.mxu0
    %v440 = vadd.f32 %v345, %v439
    %v441 = vpop.f32.mrf.mxu0
    %442 = vmatprep.mubr.f32.mxu0 0.0
    %v443 = vand.u32 %v63, 4294901760
    %v444 = vsub.f32 %v63, %v443
    %v445 = vand.u32 %v444, 4294901760
    %446 = vmatmul.mubr.f32.gmra.mxu0 %v445
    %v447 = vpop.f32.mrf.mxu0
    %v448 = vadd.f32 %v352, %v447
    %v449 = vpop.f32.mrf.mxu0
    %450 = vmatprep.mubr.f32.mxu0 0.0
    %v451 = vand.u32 %v66, 4294901760
    %v452 = vsub.f32 %v66, %v451
    %v453 = vand.u32 %v452, 4294901760
    %454 = vmatmul.mubr.f32.gmra.mxu0 %v453
    %v455 = vpop.f32.mrf.mxu0
    %v456 = vadd.f32 %v359, %v455
    %v457 = vpop.f32.mrf.mxu0
    %458 = vmatprep.mubr.f32.mxu0 0.0
    %v459 = vand.u32 %v69, 4294901760
    %v460 = vsub.f32 %v69, %v459
    %v461 = vand.u32 %v460, 4294901760
    %462 = vmatmul.mubr.f32.gmra.mxu0 %v461
    %v463 = vpop.f32.mrf.mxu0
    %v464 = vadd.f32 %v366, %v463
    %v465 = vpop.f32.mrf.mxu0
    %466 = vdwg.mxu0
    %467 = vmatprep.subr.mxu0 0.0
    %468 = vmatpush1.xpose.msra.mxu0 0.0
    %469 = vmatprep.subr.mxu0 0.0
    %470 = vmatpush1.xpose.msra.mxu0 0.0
    %471 = vmatprep.subr.mxu0 0.0
    %472 = vmatpush1.xpose.msra.mxu0 0.0
    %473 = vmatprep.subr.mxu0 0.0
    %474 = vmatpush1.xpose.msra.mxu0 0.0
    %475 = vmatprep.subr.mxu0 0.0
    %476 = vmatpush1.xpose.msra.mxu0 0.0
    %477 = vmatprep.subr.mxu0 0.0
    %478 = vmatpush1.xpose.msra.mxu0 0.0
    %479 = vmatprep.subr.mxu0 0.0
    %480 = vmatpush1.xpose.msra.mxu0 0.0
    %481 = vmatprep.subr.mxu0 0.0
    %482 = vmatpush1.xpose.msra.mxu0 0.0
    %483 = vmatprep.subr.mxu0 0.0
    %484 = vmatpush1.xpose.msra.mxu0 0.0
    %485 = vmatprep.subr.mxu0 0.0
    %486 = vmatpush1.xpose.msra.mxu0 0.0
    %487 = vmatprep.subr.mxu0 0.0
    %488 = vmatpush1.xpose.msra.mxu0 0.0
    %489 = vmatprep.subr.mxu0 0.0
    %490 = vmatpush1.xpose.msra.mxu0 0.0
    %491 = vmatprep.subr.mxu0 0.0
    %492 = vmatpush1.xpose.msra.mxu0 0.0
    %493 = vmatprep.subr.mxu0 0.0
    %494 = vmatpush1.xpose.msra.mxu0 0.0
    %495 = vmatprep.subr.mxu0 0.0
    %496 = vmatpush1.xpose.msra.mxu0 0.0
    %497 = vmatprep.subr.mxu0 0.0
    %v498 = vand.u32 %v72, 4294901760
    %v499 = vsub.f32 %v72, %v498
    %v500 = vand.u32 %v499, 4294901760
    %501 = vmatpush1.xpose.msra.mxu0 %v500
    %502 = vmatprep.subr.mxu0 0.0
    %503 = vmatpush2.xpose.msra.mxu0 0.0
    %504 = vmatprep.subr.mxu0 0.0
    %505 = vmatpush2.xpose.msra.mxu0 0.0
    %506 = vmatprep.subr.mxu0 0.0
    %507 = vmatpush2.xpose.msra.mxu0 0.0
    %508 = vmatprep.subr.mxu0 0.0
    %509 = vmatpush2.xpose.msra.mxu0 0.0
    %510 = vmatprep.subr.mxu0 0.0
    %511 = vmatpush2.xpose.msra.mxu0 0.0
    %512 = vmatprep.subr.mxu0 0.0
    %513 = vmatpush2.xpose.msra.mxu0 0.0
    %514 = vmatprep.subr.mxu0 0.0
    %515 = vmatpush2.xpose.msra.mxu0 0.0
    %516 = vmatprep.subr.mxu0 0.0
    %517 = vmatpush2.xpose.msra.mxu0 0.0
    %518 = vmatprep.subr.mxu0 0.0
    %519 = vmatpush2.xpose.msra.mxu0 0.0
    %520 = vmatprep.subr.mxu0 0.0
    %521 = vmatpush2.xpose.msra.mxu0 0.0
    %522 = vmatprep.subr.mxu0 0.0
    %523 = vmatpush2.xpose.msra.mxu0 0.0
    %524 = vmatprep.subr.mxu0 0.0
    %525 = vmatpush2.xpose.msra.mxu0 0.0
    %526 = vmatprep.subr.mxu0 0.0
    %527 = vmatpush2.xpose.msra.mxu0 0.0
    %528 = vmatprep.subr.mxu0 0.0
    %529 = vmatpush2.xpose.msra.mxu0 0.0
    %530 = vmatprep.subr.mxu0 0.0
    %531 = vmatpush2.xpose.msra.mxu0 0.0
    %532 = vmatprep.subr.mxu0 0.0
    %533 = vmatpush2.xpose.msra.mxu0 0.0
    %534 = vmatprep.mubr.f32.mxu0 0.0
    %v535 = vand.u32 %v60, 4294901760
    %536 = vmatmul.mubr.f32.gmra.mxu0 %v535
    %v537 = vpop.f32.mrf.mxu0
    %v538 = vadd.f32 %v440, %v537
    %v539 = vpop.f32.mrf.mxu0
    %540 = vmatprep.mubr.f32.mxu0 0.0
    %v541 = vand.u32 %v63, 4294901760
    %542 = vmatmul.mubr.f32.gmra.mxu0 %v541
    %v543 = vpop.f32.mrf.mxu0
    %v544 = vadd.f32 %v448, %v543
    %v545 = vpop.f32.mrf.mxu0
    %546 = vmatprep.mubr.f32.mxu0 0.0
    %v547 = vand.u32 %v66, 4294901760
    %548 = vmatmul.mubr.f32.gmra.mxu0 %v547
    %v549 = vpop.f32.mrf.mxu0
    %v550 = vadd.f32 %v456, %v549
    %v551 = vpop.f32.mrf.mxu0
    %552 = vmatprep.mubr.f32.mxu0 0.0
    %v553 = vand.u32 %v69, 4294901760
    %554 = vmatmul.mubr.f32.gmra.mxu0 %v553
    %v555 = vpop.f32.mrf.mxu0
    %v556 = vadd.f32 %v464, %v555
    %v557 = vpop.f32.mrf.mxu0
    %558 = vdwg.mxu0
    %559 = vmatprep.subr.mxu0 0.0
    %560 = vmatpush1.xpose.msra.mxu0 0.0
    %561 = vmatprep.subr.mxu0 0.0
    %562 = vmatpush1.xpose.msra.mxu0 0.0
    %563 = vmatprep.subr.mxu0 0.0
    %564 = vmatpush1.xpose.msra.mxu0 0.0
    %565 = vmatprep.subr.mxu0 0.0
    %566 = vmatpush1.xpose.msra.mxu0 0.0
    %567 = vmatprep.subr.mxu0 0.0
    %568 = vmatpush1.xpose.msra.mxu0 0.0
    %569 = vmatprep.subr.mxu0 0.0
    %570 = vmatpush1.xpose.msra.mxu0 0.0
    %571 = vmatprep.subr.mxu0 0.0
    %572 = vmatpush1.xpose.msra.mxu0 0.0
    %573 = vmatprep.subr.mxu0 0.0
    %574 = vmatpush1.xpose.msra.mxu0 0.0
    %575 = vmatprep.subr.mxu0 0.0
    %576 = vmatpush1.xpose.msra.mxu0 0.0
    %577 = vmatprep.subr.mxu0 0.0
    %578 = vmatpush1.xpose.msra.mxu0 0.0
    %579 = vmatprep.subr.mxu0 0.0
    %580 = vmatpush1.xpose.msra.mxu0 0.0
    %581 = vmatprep.subr.mxu0 0.0
    %582 = vmatpush1.xpose.msra.mxu0 0.0
    %583 = vmatprep.subr.mxu0 0.0
    %584 = vmatpush1.xpose.msra.mxu0 0.0
    %585 = vmatprep.subr.mxu0 0.0
    %586 = vmatpush1.xpose.msra.mxu0 0.0
    %587 = vmatprep.subr.mxu0 0.0
    %588 = vmatpush1.xpose.msra.mxu0 0.0
    %589 = vmatprep.subr.mxu0 0.0
    %v590 = vand.u32 %v72, 4294901760
    %591 = vmatpush1.xpose.msra.mxu0 %v590
    %592 = vmatprep.subr.mxu0 0.0
    %593 = vmatpush2.xpose.msra.mxu0 0.0
    %594 = vmatprep.subr.mxu0 0.0
    %595 = vmatpush2.xpose.msra.mxu0 0.0
    %596 = vmatprep.subr.mxu0 0.0
    %597 = vmatpush2.xpose.msra.mxu0 0.0
    %598 = vmatprep.subr.mxu0 0.0
    %599 = vmatpush2.xpose.msra.mxu0 0.0
    %600 = vmatprep.subr.mxu0 0.0
    %601 = vmatpush2.xpose.msra.mxu0 0.0
    %602 = vmatprep.subr.mxu0 0.0
    %603 = vmatpush2.xpose.msra.mxu0 0.0
    %604 = vmatprep.subr.mxu0 0.0
    %605 = vmatpush2.xpose.msra.mxu0 0.0
    %606 = vmatprep.subr.mxu0 0.0
    %607 = vmatpush2.xpose.msra.mxu0 0.0
    %608 = vmatprep.subr.mxu0 0.0
    %609 = vmatpush2.xpose.msra.mxu0 0.0
    %610 = vmatprep.subr.mxu0 0.0
    %611 = vmatpush2.xpose.msra.mxu0 0.0
    %612 = vmatprep.subr.mxu0 0.0
    %613 = vmatpush2.xpose.msra.mxu0 0.0
    %614 = vmatprep.subr.mxu0 0.0
    %615 = vmatpush2.xpose.msra.mxu0 0.0
    %616 = vmatprep.subr.mxu0 0.0
    %617 = vmatpush2.xpose.msra.mxu0 0.0
    %618 = vmatprep.subr.mxu0 0.0
    %619 = vmatpush2.xpose.msra.mxu0 0.0
    %620 = vmatprep.subr.mxu0 0.0
    %621 = vmatpush2.xpose.msra.mxu0 0.0
    %622 = vmatprep.subr.mxu0 0.0
    %623 = vmatpush2.xpose.msra.mxu0 0.0
    %624 = vmatprep.mubr.f32.mxu0 0.0
    %v625 = vand.u32 %v60, 4294901760
    %626 = vmatmul.mubr.f32.gmra.mxu0 %v625
    %v627 = vpop.f32.mrf.mxu0
    %v628 = vadd.f32 %v538, %v627
    %v629 = vpop.f32.mrf.mxu0
    %630 = vmatprep.mubr.f32.mxu0 0.0
    %v631 = vand.u32 %v63, 4294901760
    %632 = vmatmul.mubr.f32.gmra.mxu0 %v631
    %v633 = vpop.f32.mrf.mxu0
    %v634 = vadd.f32 %v544, %v633
    %v635 = vpop.f32.mrf.mxu0
    %636 = vmatprep.mubr.f32.mxu0 0.0
    %v637 = vand.u32 %v66, 4294901760
    %638 = vmatmul.mubr.f32.gmra.mxu0 %v637
    %v639 = vpop.f32.mrf.mxu0
    %v640 = vadd.f32 %v550, %v639
    %v641 = vpop.f32.mrf.mxu0
    %642 = vmatprep.mubr.f32.mxu0 0.0
    %v643 = vand.u32 %v69, 4294901760
    %644 = vmatmul.mubr.f32.gmra.mxu0 %v643
    %v645 = vpop.f32.mrf.mxu0
    %v646 = vadd.f32 %v556, %v645
    %v647 = vpop.f32.mrf.mxu0
    %648 = vdwg.mxu0
    %v649 = vtanh.pop %v628
    %v650 = vtanh.pop %v634
    %v651 = vtanh.pop %v640
    %v652 = vtanh.pop %v646
    %v653 = vld [vmem:[%s3] sm:$0xff]
    %v654 = vld [vmem:[%s3 + $0x8] sm:$0xff]
    %v655 = vld [vmem:[%s3 + $0x10] sm:$0xff]
    %v656 = vld [vmem:[%s3 + $0x18] sm:$0xff]
    %v657 = vld [vmem:[%s4] sm:$0xff]
    %v658 = vld [vmem:[%s4 + $0x8] sm:$0xff]
    %v659 = vld [vmem:[%s4 + $0x10] sm:$0xff]
    %v660 = vld [vmem:[%s4 + $0x18] sm:$0xff]
    %662 = vset.pattern.permute.xlu0 0
    %663 = vperm.xlu0 %662, %v657
    %v664 = vpop.permute.xlu0 %663
    %667 = vset.pattern.permute.xlu0 0
    %668 = vperm.xlu0 %667, %v658
    %v669 = vpop.permute.xlu0 %668
    %672 = vset.pattern.permute.xlu0 0
    %673 = vperm.xlu0 %672, %v659
    %v674 = vpop.permute.xlu0 %673
    %677 = vset.pattern.permute.xlu0 0
    %678 = vperm.xlu0 %677, %v660
    %v679 = vpop.permute.xlu0 %678
    %v682 = vsel %vm58, %v653, 0
    %v685 = vsel %vm58, %v654, 0
    %v688 = vsel %vm58, %v655, 0
    %v691 = vsel %vm58, %v656, 0
    %693 = vmatprep.subr.mxu0 0.0
    %694 = vmatpush1.msra.mxu0 0.0
    %695 = vmatprep.subr.mxu0 0.0
    %696 = vmatpush1.msra.mxu0 0.0
    %697 = vmatprep.subr.mxu0 0.0
    %698 = vmatpush1.msra.mxu0 0.0
    %699 = vmatprep.subr.mxu0 0.0
    %700 = vmatpush1.msra.mxu0 0.0
    %701 = vmatprep.subr.mxu0 0.0
    %702 = vmatpush1.msra.mxu0 0.0
    %703 = vmatprep.subr.mxu0 0.0
    %704 = vmatpush1.msra.mxu0 0.0
    %705 = vmatprep.subr.mxu0 0.0
    %706 = vmatpush1.msra.mxu0 0.0
    %707 = vmatprep.subr.mxu0 0.0
    %708 = vmatpush1.msra.mxu0 0.0
    %709 = vmatprep.subr.mxu0 0.0
    %710 = vmatpush1.msra.mxu0 0.0
    %711 = vmatprep.subr.mxu0 0.0
    %712 = vmatpush1.msra.mxu0 0.0
    %713 = vmatprep.subr.mxu0 0.0
    %714 = vmatpush1.msra.mxu0 0.0
    %715 = vmatprep.subr.mxu0 0.0
    %716 = vmatpush1.msra.mxu0 0.0
    %717 = vmatprep.subr.mxu0 0.0
    %v718 = vand.u32 %v652, 4294901760
    %719 = vmatpush1.msra.mxu0 %v718
    %720 = vmatprep.subr.mxu0 0.0
    %v721 = vand.u32 %v651, 4294901760
    %722 = vmatpush1.msra.mxu0 %v721
    %723 = vmatprep.subr.mxu0 0.0
    %v724 = vand.u32 %v650, 4294901760
    %725 = vmatpush1.msra.mxu0 %v724
    %726 = vmatprep.subr.mxu0 0.0
    %v727 = vand.u32 %v649, 4294901760
    %728 = vmatpush1.msra.mxu0 %v727
    %729 = vmatprep.subr.mxu0 0.0
    %730 = vmatpush2.msra.mxu0 0.0
    %731 = vmatprep.subr.mxu0 0.0
    %732 = vmatpush2.msra.mxu0 0.0
    %733 = vmatprep.subr.mxu0 0.0
    %734 = vmatpush2.msra.mxu0 0.0
    %735 = vmatprep.subr.mxu0 0.0
    %736 = vmatpush2.msra.mxu0 0.0
    %737 = vmatprep.subr.mxu0 0.0
    %738 = vmatpush2.msra.mxu0 0.0
    %739 = vmatprep.subr.mxu0 0.0
    %740 = vmatpush2.msra.mxu0 0.0
    %741 = vmatprep.subr.mxu0 0.0
    %742 = vmatpush2.msra.mxu0 0.0
    %743 = vmatprep.subr.mxu0 0.0
    %744 = vmatpush2.msra.mxu0 0.0
    %745 = vmatprep.subr.mxu0 0.0
    %746 = vmatpush2.msra.mxu0 0.0
    %747 = vmatprep.subr.mxu0 0.0
    %748 = vmatpush2.msra.mxu0 0.0
    %749 = vmatprep.subr.mxu0 0.0
    %750 = vmatpush2.msra.mxu0 0.0
    %751 = vmatprep.subr.mxu0 0.0
    %752 = vmatpush2.msra.mxu0 0.0
    %753 = vmatprep.subr.mxu0 0.0
    %754 = vmatpush2.msra.mxu0 0.0
    %755 = vmatprep.subr.mxu0 0.0
    %756 = vmatpush2.msra.mxu0 0.0
    %757 = vmatprep.subr.mxu0 0.0
    %758 = vmatpush2.msra.mxu0 0.0
    %759 = vmatprep.subr.mxu0 0.0
    %760 = vmatpush2.msra.mxu0 0.0
    %761 = vmatprep.mubr.f32.mxu0 0.0
    %v762 = vand.u32 %v682, 4294901760
    %v763 = vsub.f32 %v682, %v762
    %v764 = vand.u32 %v763, 4294901760
    %v765 = vsub.f32 %v763, %v764
    %v766 = vand.u32 %v765, 4294901760
    %767 = vmatmul.mubr.f32.gmra.mxu0 %v766
    %v768 = vpop.f32.mrf.mxu0
    %v769 = vadd.f32 %v664, %v768
    %v770 = vpop.f32.mrf.mxu0
    %771 = vmatprep.mubr.f32.mxu0 0.0
    %v772 = vand.u32 %v685, 4294901760
    %v773 = vsub.f32 %v685, %v772
    %v774 = vand.u32 %v773, 4294901760
    %v775 = vsub.f32 %v773, %v774
    %v776 = vand.u32 %v775, 4294901760
    %777 = vmatmul.mubr.f32.gmra.mxu0 %v776
    %v778 = vpop.f32.mrf.mxu0
    %v779 = vadd.f32 %v669, %v778
    %v780 = vpop.f32.mrf.mxu0
    %781 = vmatprep.mubr.f32.mxu0 0.0
    %v782 = vand.u32 %v688, 4294901760
    %v783 = vsub.f32 %v688, %v782
    %v784 = vand.u32 %v783, 4294901760
    %v785 = vsub.f32 %v783, %v784
    %v786 = vand.u32 %v785, 4294901760
    %787 = vmatmul.mubr.f32.gmra.mxu0 %v786
    %v788 = vpop.f32.mrf.mxu0
    %v789 = vadd.f32 %v674, %v788
    %v790 = vpop.f32.mrf.mxu0
    %791 = vmatprep.mubr.f32.mxu0 0.0
    %v792 = vand.u32 %v691, 4294901760
    %v793 = vsub.f32 %v691, %v792
    %v794 = vand.u32 %v793, 4294901760
    %v795 = vsub.f32 %v793, %v794
    %v796 = vand.u32 %v795, 4294901760
    %797 = vmatmul.mubr.f32.gmra.mxu0 %v796
    %v798 = vpop.f32.mrf.mxu0
    %v799 = vadd.f32 %v679, %v798
    %v800 = vpop.f32.mrf.mxu0
    %801 = vdwg.mxu0
    %802 = vmatprep.subr.mxu0 0.0
    %803 = vmatpush1.msra.mxu0 0.0
    %804 = vmatprep.subr.mxu0 0.0
    %805 = vmatpush1.msra.mxu0 0.0
    %806 = vmatprep.subr.mxu0 0.0
    %807 = vmatpush1.msra.mxu0 0.0
    %808 = vmatprep.subr.mxu0 0.0
    %809 = vmatpush1.msra.mxu0 0.0
    %810 = vmatprep.subr.mxu0 0.0
    %811 = vmatpush1.msra.mxu0 0.0
    %812 = vmatprep.subr.mxu0 0.0
    %813 = vmatpush1.msra.mxu0 0.0
    %814 = vmatprep.subr.mxu0 0.0
    %815 = vmatpush1.msra.mxu0 0.0
    %816 = vmatprep.subr.mxu0 0.0
    %817 = vmatpush1.msra.mxu0 0.0
    %818 = vmatprep.subr.mxu0 0.0
    %819 = vmatpush1.msra.mxu0 0.0
    %820 = vmatprep.subr.mxu0 0.0
    %821 = vmatpush1.msra.mxu0 0.0
    %822 = vmatprep.subr.mxu0 0.0
    %823 = vmatpush1.msra.mxu0 0.0
    %824 = vmatprep.subr.mxu0 0.0
    %825 = vmatpush1.msra.mxu0 0.0
    %826 = vmatprep.subr.mxu0 0.0
    %v827 = vand.u32 %v652, 4294901760
    %v828 = vsub.f32 %v652, %v827
    %v829 = vand.u32 %v828, 4294901760
    %v830 = vsub.f32 %v828, %v829
    %v831 = vand.u32 %v830, 4294901760
    %832 = vmatpush1.msra.mxu0 %v831
    %833 = vmatprep.subr.mxu0 0.0
    %v834 = vand.u32 %v651, 4294901760
    %v835 = vsub.f32 %v651, %v834
    %v836 = vand.u32 %v835, 4294901760
    %v837 = vsub.f32 %v835, %v836
    %v838 = vand.u32 %v837, 4294901760
    %839 = vmatpush1.msra.mxu0 %v838
    %840 = vmatprep.subr.mxu0 0.0
    %v841 = vand.u32 %v650, 4294901760
    %v842 = vsub.f32 %v650, %v841
    %v843 = vand.u32 %v842, 4294901760
    %v844 = vsub.f32 %v842, %v843
    %v845 = vand.u32 %v844, 4294901760
    %846 = vmatpush1.msra.mxu0 %v845
    %847 = vmatprep.subr.mxu0 0.0
    %v848 = vand.u32 %v649, 4294901760
    %v849 = vsub.f32 %v649, %v848
    %v850 = vand.u32 %v849, 4294901760
    %v851 = vsub.f32 %v849, %v850
    %v852 = vand.u32 %v851, 4294901760
    %853 = vmatpush1.msra.mxu0 %v852
    %854 = vmatprep.subr.mxu0 0.0
    %855 = vmatpush2.msra.mxu0 0.0
    %856 = vmatprep.subr.mxu0 0.0
    %857 = vmatpush2.msra.mxu0 0.0
    %858 = vmatprep.subr.mxu0 0.0
    %859 = vmatpush2.msra.mxu0 0.0
    %860 = vmatprep.subr.mxu0 0.0
    %861 = vmatpush2.msra.mxu0 0.0
    %862 = vmatprep.subr.mxu0 0.0
    %863 = vmatpush2.msra.mxu0 0.0
    %864 = vmatprep.subr.mxu0 0.0
    %865 = vmatpush2.msra.mxu0 0.0
    %866 = vmatprep.subr.mxu0 0.0
    %867 = vmatpush2.msra.mxu0 0.0
    %868 = vmatprep.subr.mxu0 0.0
    %869 = vmatpush2.msra.mxu0 0.0
    %870 = vmatprep.subr.mxu0 0.0
    %871 = vmatpush2.msra.mxu0 0.0
    %872 = vmatprep.subr.mxu0 0.0
    %873 = vmatpush2.msra.mxu0 0.0
    %874 = vmatprep.subr.mxu0 0.0
    %875 = vmatpush2.msra.mxu0 0.0
    %876 = vmatprep.subr.mxu0 0.0
    %877 = vmatpush2.msra.mxu0 0.0
    %878 = vmatprep.subr.mxu0 0.0
    %879 = vmatpush2.msra.mxu0 0.0
    %880 = vmatprep.subr.mxu0 0.0
    %881 = vmatpush2.msra.mxu0 0.0
    %882 = vmatprep.subr.mxu0 0.0
    %883 = vmatpush2.msra.mxu0 0.0
    %884 = vmatprep.subr.mxu0 0.0
    %885 = vmatpush2.msra.mxu0 0.0
    %886 = vmatprep.mubr.f32.mxu0 0.0
    %v887 = vand.u32 %v682, 4294901760
    %888 = vmatmul.mubr.f32.gmra.mxu0 %v887
    %v889 = vpop.f32.mrf.mxu0
    %v890 = vadd.f32 %v769, %v889
    %v891 = vpop.f32.mrf.mxu0
    %892 = vmatprep.mubr.f32.mxu0 0.0
    %v893 = vand.u32 %v685, 4294901760
    %894 = vmatmul.mubr.f32.gmra.mxu0 %v893
    %v895 = vpop.f32.mrf.mxu0
    %v896 = vadd.f32 %v779, %v895
    %v897 = vpop.f32.mrf.mxu0
    %898 = vmatprep.mubr.f32.mxu0 0.0
    %v899 = vand.u32 %v688, 4294901760
    %900 = vmatmul.mubr.f32.gmra.mxu0 %v899
    %v901 = vpop.f32.mrf.mxu0
    %v902 = vadd.f32 %v789, %v901
    %v903 = vpop.f32.mrf.mxu0
    %904 = vmatprep.mubr.f32.mxu0 0.0
    %v905 = vand.u32 %v691, 4294901760
    %906 = vmatmul.mubr.f32.gmra.mxu0 %v905
    %v907 = vpop.f32.mrf.mxu0
    %v908 = vadd.f32 %v799, %v907
    %v909 = vpop.f32.mrf.mxu0
    %910 = vdwg.mxu0
    %911 = vmatprep.subr.mxu0 0.0
    %912 = vmatpush1.msra.mxu0 0.0
    %913 = vmatprep.subr.mxu0 0.0
    %914 = vmatpush1.msra.mxu0 0.0
    %915 = vmatprep.subr.mxu0 0.0
    %916 = vmatpush1.msra.mxu0 0.0
    %917 = vmatprep.subr.mxu0 0.0
    %918 = vmatpush1.msra.mxu0 0.0
    %919 = vmatprep.subr.mxu0 0.0
    %920 = vmatpush1.msra.mxu0 0.0
    %921 = vmatprep.subr.mxu0 0.0
    %922 = vmatpush1.msra.mxu0 0.0
    %923 = vmatprep.subr.mxu0 0.0
    %924 = vmatpush1.msra.mxu0 0.0
    %925 = vmatprep.subr.mxu0 0.0
    %926 = vmatpush1.msra.mxu0 0.0
    %927 = vmatprep.subr.mxu0 0.0
    %928 = vmatpush1.msra.mxu0 0.0
    %929 = vmatprep.subr.mxu0 0.0
    %930 = vmatpush1.msra.mxu0 0.0
    %931 = vmatprep.subr.mxu0 0.0
    %932 = vmatpush1.msra.mxu0 0.0
    %933 = vmatprep.subr.mxu0 0.0
    %934 = vmatpush1.msra.mxu0 0.0
    %935 = vmatprep.subr.mxu0 0.0
    %v936 = vand.u32 %v652, 4294901760
    %v937 = vsub.f32 %v652, %v936
    %938 = vmatpush1.msra.mxu0 %v937
    %939 = vmatprep.subr.mxu0 0.0
    %v940 = vand.u32 %v651, 4294901760
    %v941 = vsub.f32 %v651, %v940
    %942 = vmatpush1.msra.mxu0 %v941
    %943 = vmatprep.subr.mxu0 0.0
    %v944 = vand.u32 %v650, 4294901760
    %v945 = vsub.f32 %v650, %v944
    %946 = vmatpush1.msra.mxu0 %v945
    %947 = vmatprep.subr.mxu0 0.0
    %v948 = vand.u32 %v649, 4294901760
    %v949 = vsub.f32 %v649, %v948
    %950 = vmatpush1.msra.mxu0 %v949
    %951 = vmatprep.subr.mxu0 0.0
    %952 = vmatpush2.msra.mxu0 0.0
    %953 = vmatprep.subr.mxu0 0.0
    %954 = vmatpush2.msra.mxu0 0.0
    %955 = vmatprep.subr.mxu0 0.0
    %956 = vmatpush2.msra.mxu0 0.0
    %957 = vmatprep.subr.mxu0 0.0
    %958 = vmatpush2.msra.mxu0 0.0
    %959 = vmatprep.subr.mxu0 0.0
    %960 = vmatpush2.msra.mxu0 0.0
    %961 = vmatprep.subr.mxu0 0.0
    %962 = vmatpush2.msra.mxu0 0.0
    %963 = vmatprep.subr.mxu0 0.0
    %964 = vmatpush2.msra.mxu0 0.0
    %965 = vmatprep.subr.mxu0 0.0
    %966 = vmatpush2.msra.mxu0 0.0
    %967 = vmatprep.subr.mxu0 0.0
    %968 = vmatpush2.msra.mxu0 0.0
    %969 = vmatprep.subr.mxu0 0.0
    %970 = vmatpush2.msra.mxu0 0.0
    %971 = vmatprep.subr.mxu0 0.0
    %972 = vmatpush2.msra.mxu0 0.0
    %973 = vmatprep.subr.mxu0 0.0
    %974 = vmatpush2.msra.mxu0 0.0
    %975 = vmatprep.subr.mxu0 0.0
    %976 = vmatpush2.msra.mxu0 0.0
    %977 = vmatprep.subr.mxu0 0.0
    %978 = vmatpush2.msra.mxu0 0.0
    %979 = vmatprep.subr.mxu0 0.0
    %980 = vmatpush2.msra.mxu0 0.0
    %981 = vmatprep.subr.mxu0 0.0
    %982 = vmatpush2.msra.mxu0 0.0
    %983 = vmatprep.mubr.f32.mxu0 0.0
    %v984 = vand.u32 %v682, 4294901760
    %v985 = vsub.f32 %v682, %v984
    %986 = vmatmul.mubr.f32.gmra.mxu0 %v985
    %v987 = vpop.f32.mrf.mxu0
    %v988 = vadd.f32 %v890, %v987
    %v989 = vpop.f32.mrf.mxu0
    %990 = vmatprep.mubr.f32.mxu0 0.0
    %v991 = vand.u32 %v685, 4294901760
    %v992 = vsub.f32 %v685, %v991
    %993 = vmatmul.mubr.f32.gmra.mxu0 %v992
    %v994 = vpop.f32.mrf.mxu0
    %v995 = vadd.f32 %v896, %v994
    %v996 = vpop.f32.mrf.mxu0
    %997 = vmatprep.mubr.f32.mxu0 0.0
    %v998 = vand.u32 %v688, 4294901760
    %v999 = vsub.f32 %v688, %v998
    %1000 = vmatmul.mubr.f32.gmra.mxu0 %v999
    %v1001 = vpop.f32.mrf.mxu0
    %v1002 = vadd.f32 %v902, %v1001
    %v1003 = vpop.f32.mrf.mxu0
    %1004 = vmatprep.mubr.f32.mxu0 0.0
    %v1005 = vand.u32 %v691, 4294901760
    %v1006 = vsub.f32 %v691, %v1005
    %1007 = vmatmul.mubr.f32.gmra.mxu0 %v1006
    %v1008 = vpop.f32.mrf.mxu0
    %v1009 = vadd.f32 %v908, %v1008
    %v1010 = vpop.f32.mrf.mxu0
    %1011 = vdwg.mxu0
    %1012 = vmatprep.subr.mxu0 0.0
    %1013 = vmatpush1.msra.mxu0 0.0
    %1014 = vmatprep.subr.mxu0 0.0
    %1015 = vmatpush1.msra.mxu0 0.0
    %1016 = vmatprep.subr.mxu0 0.0
    %1017 = vmatpush1.msra.mxu0 0.0
    %1018 = vmatprep.subr.mxu0 0.0
    %1019 = vmatpush1.msra.mxu0 0.0
    %1020 = vmatprep.subr.mxu0 0.0
    %1021 = vmatpush1.msra.mxu0 0.0
    %1022 = vmatprep.subr.mxu0 0.0
    %1023 = vmatpush1.msra.mxu0 0.0
    %1024 = vmatprep.subr.mxu0 0.0
    %1025 = vmatpush1.msra.mxu0 0.0
    %1026 = vmatprep.subr.mxu0 0.0
    %1027 = vmatpush1.msra.mxu0 0.0
    %1028 = vmatprep.subr.mxu0 0.0
    %1029 = vmatpush1.msra.mxu0 0.0
    %1030 = vmatprep.subr.mxu0 0.0
    %1031 = vmatpush1.msra.mxu0 0.0
    %1032 = vmatprep.subr.mxu0 0.0
    %1033 = vmatpush1.msra.mxu0 0.0
    %1034 = vmatprep.subr.mxu0 0.0
    %1035 = vmatpush1.msra.mxu0 0.0
    %1036 = vmatprep.subr.mxu0 0.0
    %v1037 = vand.u32 %v652, 4294901760
    %1038 = vmatpush1.msra.mxu0 %v1037
    %1039 = vmatprep.subr.mxu0 0.0
    %v1040 = vand.u32 %v651, 4294901760
    %1041 = vmatpush1.msra.mxu0 %v1040
    %1042 = vmatprep.subr.mxu0 0.0
    %v1043 = vand.u32 %v650, 4294901760
    %1044 = vmatpush1.msra.mxu0 %v1043
    %1045 = vmatprep.subr.mxu0 0.0
    %v1046 = vand.u32 %v649, 4294901760
    %1047 = vmatpush1.msra.mxu0 %v1046
    %1048 = vmatprep.subr.mxu0 0.0
    %1049 = vmatpush2.msra.mxu0 0.0
    %1050 = vmatprep.subr.mxu0 0.0
    %1051 = vmatpush2.msra.mxu0 0.0
    %1052 = vmatprep.subr.mxu0 0.0
    %1053 = vmatpush2.msra.mxu0 0.0
    %1054 = vmatprep.subr.mxu0 0.0
    %1055 = vmatpush2.msra.mxu0 0.0
    %1056 = vmatprep.subr.mxu0 0.0
    %1057 = vmatpush2.msra.mxu0 0.0
    %1058 = vmatprep.subr.mxu0 0.0
    %1059 = vmatpush2.msra.mxu0 0.0
    %1060 = vmatprep.subr.mxu0 0.0
    %1061 = vmatpush2.msra.mxu0 0.0
    %1062 = vmatprep.subr.mxu0 0.0
    %1063 = vmatpush2.msra.mxu0 0.0
    %1064 = vmatprep.subr.mxu0 0.0
    %1065 = vmatpush2.msra.mxu0 0.0
    %1066 = vmatprep.subr.mxu0 0.0
    %1067 = vmatpush2.msra.mxu0 0.0
    %1068 = vmatprep.subr.mxu0 0.0
    %1069 = vmatpush2.msra.mxu0 0.0
    %1070 = vmatprep.subr.mxu0 0.0
    %1071 = vmatpush2.msra.mxu0 0.0
    %1072 = vmatprep.subr.mxu0 0.0
    %1073 = vmatpush2.msra.mxu0 0.0
    %1074 = vmatprep.subr.mxu0 0.0
    %1075 = vmatpush2.msra.mxu0 0.0
    %1076 = vmatprep.subr.mxu0 0.0
    %1077 = vmatpush2.msra.mxu0 0.0
    %1078 = vmatprep.subr.mxu0 0.0
    %1079 = vmatpush2.msra.mxu0 0.0
    %1080 = vmatprep.mubr.f32.mxu0 0.0
    %v1081 = vand.u32 %v682, 4294901760
    %v1082 = vsub.f32 %v682, %v1081
    %v1083 = vand.u32 %v1082, 4294901760
    %1084 = vmatmul.mubr.f32.gmra.mxu0 %v1083
    %v1085 = vpop.f32.mrf.mxu0
    %v1086 = vadd.f32 %v988, %v1085
    %v1087 = vpop.f32.mrf.mxu0
    %1088 = vmatprep.mubr.f32.mxu0 0.0
    %v1089 = vand.u32 %v685, 4294901760
    %v1090 = vsub.f32 %v685, %v1089
    %v1091 = vand.u32 %v1090, 4294901760
    %1092 = vmatmul.mubr.f32.gmra.mxu0 %v1091
    %v1093 = vpop.f32.mrf.mxu0
    %v1094 = vadd.f32 %v995, %v1093
    %v1095 = vpop.f32.mrf.mxu0
    %1096 = vmatprep.mubr.f32.mxu0 0.0
    %v1097 = vand.u32 %v688, 4294901760
    %v1098 = vsub.f32 %v688, %v1097
    %v1099 = vand.u32 %v1098, 4294901760
    %1100 = vmatmul.mubr.f32.gmra.mxu0 %v1099
    %v1101 = vpop.f32.mrf.mxu0
    %v1102 = vadd.f32 %v1002, %v1101
    %v1103 = vpop.f32.mrf.mxu0
    %1104 = vmatprep.mubr.f32.mxu0 0.0
    %v1105 = vand.u32 %v691, 4294901760
    %v1106 = vsub.f32 %v691, %v1105
    %v1107 = vand.u32 %v1106, 4294901760
    %1108 = vmatmul.mubr.f32.gmra.mxu0 %v1107
    %v1109 = vpop.f32.mrf.mxu0
    %v1110 = vadd.f32 %v1009, %v1109
    %v1111 = vpop.f32.mrf.mxu0
    %1112 = vdwg.mxu0
    %1113 = vmatprep.subr.mxu0 0.0
    %1114 = vmatpush1.msra.mxu0 0.0
    %1115 = vmatprep.subr.mxu0 0.0
    %1116 = vmatpush1.msra.mxu0 0.0
    %1117 = vmatprep.subr.mxu0 0.0
    %1118 = vmatpush1.msra.mxu0 0.0
    %1119 = vmatprep.subr.mxu0 0.0
    %1120 = vmatpush1.msra.mxu0 0.0
    %1121 = vmatprep.subr.mxu0 0.0
    %1122 = vmatpush1.msra.mxu0 0.0
    %1123 = vmatprep.subr.mxu0 0.0
    %1124 = vmatpush1.msra.mxu0 0.0
    %1125 = vmatprep.subr.mxu0 0.0
    %1126 = vmatpush1.msra.mxu0 0.0
    %1127 = vmatprep.subr.mxu0 0.0
    %1128 = vmatpush1.msra.mxu0 0.0
    %1129 = vmatprep.subr.mxu0 0.0
    %1130 = vmatpush1.msra.mxu0 0.0
    %1131 = vmatprep.subr.mxu0 0.0
    %1132 = vmatpush1.msra.mxu0 0.0
    %1133 = vmatprep.subr.mxu0 0.0
    %1134 = vmatpush1.msra.mxu0 0.0
    %1135 = vmatprep.subr.mxu0 0.0
    %1136 = vmatpush1.msra.mxu0 0.0
    %1137 = vmatprep.subr.mxu0 0.0
    %v1138 = vand.u32 %v652, 4294901760
    %v1139 = vsub.f32 %v652, %v1138
    %v1140 = vand.u32 %v1139, 4294901760
    %1141 = vmatpush1.msra.mxu0 %v1140
    %1142 = vmatprep.subr.mxu0 0.0
    %v1143 = vand.u32 %v651, 4294901760
    %v1144 = vsub.f32 %v651, %v1143
    %v1145 = vand.u32 %v1144, 4294901760
    %1146 = vmatpush1.msra.mxu0 %v1145
    %1147 = vmatprep.subr.mxu0 0.0
    %v1148 = vand.u32 %v650, 4294901760
    %v1149 = vsub.f32 %v650, %v1148
    %v1150 = vand.u32 %v1149, 4294901760
    %1151 = vmatpush1.msra.mxu0 %v1150
    %1152 = vmatprep.subr.mxu0 0.0
    %v1153 = vand.u32 %v649, 4294901760
    %v1154 = vsub.f32 %v649, %v1153
    %v1155 = vand.u32 %v1154, 4294901760
    %1156 = vmatpush1.msra.mxu0 %v1155
    %1157 = vmatprep.subr.mxu0 0.0
    %1158 = vmatpush2.msra.mxu0 0.0
    %1159 = vmatprep.subr.mxu0 0.0
    %1160 = vmatpush2.msra.mxu0 0.0
    %1161 = vmatprep.subr.mxu0 0.0
    %1162 = vmatpush2.msra.mxu0 0.0
    %1163 = vmatprep.subr.mxu0 0.0
    %1164 = vmatpush2.msra.mxu0 0.0
    %1165 = vmatprep.subr.mxu0 0.0
    %1166 = vmatpush2.msra.mxu0 0.0
    %1167 = vmatprep.subr.mxu0 0.0
    %1168 = vmatpush2.msra.mxu0 0.0
    %1169 = vmatprep.subr.mxu0 0.0
    %1170 = vmatpush2.msra.mxu0 0.0
    %1171 = vmatprep.subr.mxu0 0.0
    %1172 = vmatpush2.msra.mxu0 0.0
    %1173 = vmatprep.subr.mxu0 0.0
    %1174 = vmatpush2.msra.mxu0 0.0
    %1175 = vmatprep.subr.mxu0 0.0
    %1176 = vmatpush2.msra.mxu0 0.0
    %1177 = vmatprep.subr.mxu0 0.0
    %1178 = vmatpush2.msra.mxu0 0.0
    %1179 = vmatprep.subr.mxu0 0.0
    %1180 = vmatpush2.msra.mxu0 0.0
    %1181 = vmatprep.subr.mxu0 0.0
    %1182 = vmatpush2.msra.mxu0 0.0
    %1183 = vmatprep.subr.mxu0 0.0
    %1184 = vmatpush2.msra.mxu0 0.0
    %1185 = vmatprep.subr.mxu0 0.0
    %1186 = vmatpush2.msra.mxu0 0.0
    %1187 = vmatprep.subr.mxu0 0.0
    %1188 = vmatpush2.msra.mxu0 0.0
    %1189 = vmatprep.mubr.f32.mxu0 0.0
    %v1190 = vand.u32 %v682, 4294901760
    %1191 = vmatmul.mubr.f32.gmra.mxu0 %v1190
    %v1192 = vpop.f32.mrf.mxu0
    %v1193 = vadd.f32 %v1086, %v1192
    %v1194 = vpop.f32.mrf.mxu0
    %1195 = vmatprep.mubr.f32.mxu0 0.0
    %v1196 = vand.u32 %v685, 4294901760
    %1197 = vmatmul.mubr.f32.gmra.mxu0 %v1196
    %v1198 = vpop.f32.mrf.mxu0
    %v1199 = vadd.f32 %v1094, %v1198
    %v1200 = vpop.f32.mrf.mxu0
    %1201 = vmatprep.mubr.f32.mxu0 0.0
    %v1202 = vand.u32 %v688, 4294901760
    %1203 = vmatmul.mubr.f32.gmra.mxu0 %v1202
    %v1204 = vpop.f32.mrf.mxu0
    %v1205 = vadd.f32 %v1102, %v1204
    %v1206 = vpop.f32.mrf.mxu0
    %1207 = vmatprep.mubr.f32.mxu0 0.0
    %v1208 = vand.u32 %v691, 4294901760
    %1209 = vmatmul.mubr.f32.gmra.mxu0 %v1208
    %v1210 = vpop.f32.mrf.mxu0
    %v1211 = vadd.f32 %v1110, %v1210
    %v1212 = vpop.f32.mrf.mxu0
    %1213 = vdwg.mxu0
    %1214 = vmatprep.subr.mxu0 0.0
    %1215 = vmatpush1.msra.mxu0 0.0
    %1216 = vmatprep.subr.mxu0 0.0
    %1217 = vmatpush1.msra.mxu0 0.0
    %1218 = vmatprep.subr.mxu0 0.0
    %1219 = vmatpush1.msra.mxu0 0.0
    %1220 = vmatprep.subr.mxu0 0.0
    %1221 = vmatpush1.msra.mxu0 0.0
    %1222 = vmatprep.subr.mxu0 0.0
    %1223 = vmatpush1.msra.mxu0 0.0
    %1224 = vmatprep.subr.mxu0 0.0
    %1225 = vmatpush1.msra.mxu0 0.0
    %1226 = vmatprep.subr.mxu0 0.0
    %1227 = vmatpush1.msra.mxu0 0.0
    %1228 = vmatprep.subr.mxu0 0.0
    %1229 = vmatpush1.msra.mxu0 0.0
    %1230 = vmatprep.subr.mxu0 0.0
    %1231 = vmatpush1.msra.mxu0 0.0
    %1232 = vmatprep.subr.mxu0 0.0
    %1233 = vmatpush1.msra.mxu0 0.0
    %1234 = vmatprep.subr.mxu0 0.0
    %1235 = vmatpush1.msra.mxu0 0.0
    %1236 = vmatprep.subr.mxu0 0.0
    %1237 = vmatpush1.msra.mxu0 0.0
    %1238 = vmatprep.subr.mxu0 0.0
    %v1239 = vand.u32 %v652, 4294901760
    %1240 = vmatpush1.msra.mxu0 %v1239
    %1241 = vmatprep.subr.mxu0 0.0
    %v1242 = vand.u32 %v651, 4294901760
    %1243 = vmatpush1.msra.mxu0 %v1242
    %1244 = vmatprep.subr.mxu0 0.0
    %v1245 = vand.u32 %v650, 4294901760
    %1246 = vmatpush1.msra.mxu0 %v1245
    %1247 = vmatprep.subr.mxu0 0.0
    %v1248 = vand.u32 %v649, 4294901760
    %1249 = vmatpush1.msra.mxu0 %v1248
    %1250 = vmatprep.subr.mxu0 0.0
    %1251 = vmatpush2.msra.mxu0 0.0
    %1252 = vmatprep.subr.mxu0 0.0
    %1253 = vmatpush2.msra.mxu0 0.0
    %1254 = vmatprep.subr.mxu0 0.0
    %1255 = vmatpush2.msra.mxu0 0.0
    %1256 = vmatprep.subr.mxu0 0.0
    %1257 = vmatpush2.msra.mxu0 0.0
    %1258 = vmatprep.subr.mxu0 0.0
    %1259 = vmatpush2.msra.mxu0 0.0
    %1260 = vmatprep.subr.mxu0 0.0
    %1261 = vmatpush2.msra.mxu0 0.0
    %1262 = vmatprep.subr.mxu0 0.0
    %1263 = vmatpush2.msra.mxu0 0.0
    %1264 = vmatprep.subr.mxu0 0.0
    %1265 = vmatpush2.msra.mxu0 0.0
    %1266 = vmatprep.subr.mxu0 0.0
    %1267 = vmatpush2.msra.mxu0 0.0
    %1268 = vmatprep.subr.mxu0 0.0
    %1269 = vmatpush2.msra.mxu0 0.0
    %1270 = vmatprep.subr.mxu0 0.0
    %1271 = vmatpush2.msra.mxu0 0.0
    %1272 = vmatprep.subr.mxu0 0.0
    %1273 = vmatpush2.msra.mxu0 0.0
    %1274 = vmatprep.subr.mxu0 0.0
    %1275 = vmatpush2.msra.mxu0 0.0
    %1276 = vmatprep.subr.mxu0 0.0
    %1277 = vmatpush2.msra.mxu0 0.0
    %1278 = vmatprep.subr.mxu0 0.0
    %1279 = vmatpush2.msra.mxu0 0.0
    %1280 = vmatprep.subr.mxu0 0.0
    %1281 = vmatpush2.msra.mxu0 0.0
    %1282 = vmatprep.mubr.f32.mxu0 0.0
    %v1283 = vand.u32 %v682, 4294901760
    %1284 = vmatmul.mubr.f32.gmra.mxu0 %v1283
    %v1285 = vpop.f32.mrf.mxu0
    %v1286 = vadd.f32 %v1193, %v1285
    %v1287 = vpop.f32.mrf.mxu0
    %1288 = vmatprep.mubr.f32.mxu0 0.0
    %v1289 = vand.u32 %v685, 4294901760
    %1290 = vmatmul.mubr.f32.gmra.mxu0 %v1289
    %v1291 = vpop.f32.mrf.mxu0
    %v1292 = vadd.f32 %v1199, %v1291
    %v1293 = vpop.f32.mrf.mxu0
    %1294 = vmatprep.mubr.f32.mxu0 0.0
    %v1295 = vand.u32 %v688, 4294901760
    %1296 = vmatmul.mubr.f32.gmra.mxu0 %v1295
    %v1297 = vpop.f32.mrf.mxu0
    %v1298 = vadd.f32 %v1205, %v1297
    %v1299 = vpop.f32.mrf.mxu0
    %1300 = vmatprep.mubr.f32.mxu0 0.0
    %v1301 = vand.u32 %v691, 4294901760
    %1302 = vmatmul.mubr.f32.gmra.mxu0 %v1301
    %v1303 = vpop.f32.mrf.mxu0
    %v1304 = vadd.f32 %v1211, %v1303
    %v1305 = vpop.f32.mrf.mxu0
    %1306 = vdwg.mxu0
    %v1307 = vtanh.pop %v1286
    %v1308 = vtanh.pop %v1292
    %v1309 = vtanh.pop %v1298
    %v1310 = vtanh.pop %v1304
    %v1311 = vld [vmem:[%s5] sm:$0xff]
    %v1312 = vld [vmem:[%s5 + $0x8] sm:$0xff]
    %v1313 = vld [vmem:[%s5 + $0x10] sm:$0xff]
    %v1314 = vld [vmem:[%s5 + $0x18] sm:$0xff]
    %v1315 = vld [vmem:[#allocation2] sm:$0x1]
    %1317 = vset.pattern.permute.xlu0 0
    %1318 = vperm.xlu0 %1317, %v1311
    %v1319 = vpop.permute.xlu0 %1318
    %1322 = vset.pattern.permute.xlu0 0
    %1323 = vperm.xlu0 %1322, %v1312
    %v1324 = vpop.permute.xlu0 %1323
    %1327 = vset.pattern.permute.xlu0 0
    %1328 = vperm.xlu0 %1327, %v1313
    %v1329 = vpop.permute.xlu0 %1328
    %1332 = vset.pattern.permute.xlu0 0
    %1333 = vperm.xlu0 %1332, %v1314
    %v1334 = vpop.permute.xlu0 %1333
    %v1336 = vmul.f32 %v1307, %v1319
    %v1337 = vmul.f32 %v1308, %v1324
    %v1338 = vmul.f32 %v1309, %v1329
    %v1339 = vmul.f32 %v1310, %v1334
    %vm1340 = vcmask 64512
    %v1341 = vsel %vm1340, %v1336, 0.0
    %v1342 = vsel %vm1340, %v1337, 0.0
    %v1343 = vadd.f32 %v1341, %v1342
    %v1344 = vsel %vm1340, %v1338, 0.0
    %v1345 = vadd.f32 %v1343, %v1344
    %v1346 = vsel %vm1340, %v1339, 0.0
    %v1347 = vadd.f32 %v1345, %v1346
    %v1348 = vrot.slane %v1347, 4
    %v1349 = vadd.f32 %v1347, %v1348
    %v1350 = vrot.slane %v1349, 2
    %v1351 = vadd.f32 %v1349, %v1350
    %v1352 = vrot.slane %v1351, 1
    %v1353 = vadd.f32 %v1351, %v1352
    %1355 = vset.pattern.permute.xlu0 0
    %1356 = vperm.xlu0 %1355, %v1315
    %v1357 = vpop.permute.xlu0 %1356
    %v1359 = vlaneseq
    %v1360 = vshrl.u32 %v1359, 7
    %v1361 = vsub.s32 0, %v1360
    %v1362 = vrot.slane %v1357, %v1361
    %v1363 = vadd.f32 %v1353, %v1362
    %vm1364 = vcmask 57344
    %1365 = vst.msk [vmem:[#allocation3] sm:$0x1] %vm1364, %v1363
    // Predicated region
    $region30: #{tpu_custom_call.1} parent=1 // pred_check
      _
    $region31: #{tpu_custom_call.1} parent=1 // pred_check_branch
      %1367 = sbr.rel (0) target = $region33
    $region32: #{tpu_custom_call.1} parent=1 // pred_region
      %s1369 = ssub.s32 16, 16
      %1370 = vsyncadd [#allocation4], %s1369
      %s1372 = sshll.u32 [#allocation3], 4
      %s1373 = int_to_ptr.vmem [resolvable:$true] %s1372
      %1375 = dma.vmem_to_hbm [thread:$0]  %s1373, 16, %s7, [#allocation4]
    $region33: #{tpu_custom_call.1} parent=1 // pred_fallthru
      _
    // Predicated region
    $region34: #{tpu_custom_call.1} parent=1 // pred_check
      _
    $region35: #{tpu_custom_call.1} parent=1 // pred_check_branch
      %1377 = sbr.rel (0) target = $region37
    $region36: #{tpu_custom_call.1} parent=1 // pred_region
      %1378 = dma.done [#allocation4], 16
    $region37: #{tpu_custom_call.1} parent=1 // pred_fallthru
      _
    %1379 = vsyncpa [#allocation4], 1

</llo_original>
